<compile_context>
chip_gen: v6e
topology: v6e:2x2x1
jax: 0.10.0
libtpu: 0.0.40
codegen_flags: <defaults>
</compile_context>

<pallas_src>
import jax
import jax.numpy as jnp
from jax import lax
from jax.experimental import pallas as pl
from jax.experimental.pallas import tpu as pltpu


def _round_up(x: int, m: int) -> int:
    return (x + m - 1) // m * m


def _compiler_params(dim_sem, est_vmem_bytes):
    kw = dict(dimension_semantics=dim_sem)
    if est_vmem_bytes > 12 * 1024 * 1024:
        # Leave headroom but stay <= ~32 MiB scoped so the same config is safe on v7x
        # (64 MiB physical VMEM); fall back to est+4MiB only if the estimate is huge.
        kw["vmem_limit_bytes"] = int(min(2 * est_vmem_bytes,
                                         max(32 * 1024 * 1024,
                                             est_vmem_bytes + 4 * 1024 * 1024)))
    return pltpu.CompilerParams(**kw)


def metapath_encoder(adjs, feats, gcn_w, gcn_b, gcn_alpha, fc_w, fc_b, attn_vec,
                     *, tile: int = 1024):
    """MetaPathEncoder forward.

    adjs      : (M, N, N)        adjs[m, dst, src] in {0, 1}
    feats     : (M, N, in_dim)   per-metapath node features
    gcn_w     : (M, in_dim, hidden); gcn_b: (M, 1, hidden); gcn_alpha: (M, 1, 1) PReLU slope
    fc_w      : (hidden, hidden) torch Linear weight; fc_b: (1, hidden); attn_vec: (1, hidden)
    returns   : (N, hidden)
    """
    M, N, _ = adjs.shape
    in_dim = feats.shape[-1]
    hidden = gcn_w.shape[-1]
    f32, bf16 = jnp.float32, jnp.bfloat16

    # ---- padded sizes -------------------------------------------------------
    Hp = _round_up(hidden, 128)              # lane-dense hidden, NO extra degree lane
    if N <= tile:
        N_pad = _round_up(N, 8)
        TM = TK = TN = N_pad                 # single node tile (full-array blocks)
    else:
        N_pad = _round_up(N, tile)
        TM = TK = TN = tile
    n_i, n_k, n_n = N_pad // TM, N_pad // TK, N_pad // TN
    # NOTE: `tile` could be derived from pltpu.get_tpu_info().vmem_capacity_bytes on-device;
    # 1024 keeps every kernel well under 12 MiB of scoped VMEM for Hp <= 512.

    # ---- prepare operands (skip pad materialization when already aligned) ----
    adj_p = adjs.astype(jnp.int8)            # {0,1} exact; narrowest dominant stream
    feat_p = feats.astype(f32)
    if N_pad != N:
        adj_p = jnp.zeros((M, N_pad, N_pad), jnp.int8).at[:, :N, :N].set(adj_p)
        feat_p = jnp.zeros((M, N_pad, in_dim), f32).at[:, :N, :].set(feat_p)

    w_p = gcn_w.astype(f32)
    b_p = gcn_b.reshape(M, 1, hidden).astype(f32)
    fc_wT_p = fc_w.T.astype(bf16)            # pre-transposed Linear weight, bf16 MXU operand
    fc_b_p = fc_b.reshape(1, hidden).astype(f32)
    attn_p = attn_vec.reshape(1, hidden).astype(f32)
    if Hp != hidden:
        w_p = jnp.zeros((M, in_dim, Hp), f32).at[:, :, :hidden].set(w_p)
        b_p = jnp.zeros((M, 1, Hp), f32).at[:, :, :hidden].set(b_p)
        fc_wT_p = jnp.zeros((Hp, Hp), bf16).at[:hidden, :hidden].set(fc_wT_p)
        fc_b_p = jnp.zeros((1, Hp), f32).at[:, :hidden].set(fc_b_p)
        attn_p = jnp.zeros((1, Hp), f32).at[:, :hidden].set(attn_p)
    alpha_p = gcn_alpha.reshape(M).astype(f32)       # PReLU slope per metapath -> SMEM

    # ========================================================================
    # Kernel 1: Z = X @ W  (hoisted; computed once per metapath), emitted in bf16.
    # ========================================================================
    def project_kernel(x_ref, w_ref, z_ref):
        z_ref[0] = jnp.dot(x_ref[0], w_ref[0],
                           preferred_element_type=jnp.float32).astype(jnp.bfloat16)

    z = pl.pallas_call(
        project_kernel,
        out_shape=jax.ShapeDtypeStruct((M, N_pad, Hp), bf16),
        grid=(M, n_k),
        in_specs=[
            pl.BlockSpec((1, TK, in_dim), lambda m, k: (m, k, 0)),
            pl.BlockSpec((1, in_dim, Hp), lambda m, k: (m, 0, 0)),
        ],
        out_specs=pl.BlockSpec((1, TK, Hp), lambda m, k: (m, k, 0)),
        compiler_params=pltpu.CompilerParams(
            dimension_semantics=("parallel", "parallel")),
        cost_estimate=pl.CostEstimate(
            flops=2 * M * N_pad * in_dim * Hp, transcendentals=0,
            bytes_accessed=4 * M * N_pad * in_dim + 4 * M * in_dim * Hp
                           + 2 * M * N_pad * Hp),
    )(feat_p, w_p)

    # ========================================================================
    # Kernel 2: tiled GraphConv (right-norm + bias + PReLU) with the semantic-
    # attention row-statistics fused into the finalize.
    #   grid = (metapath, dst-tile, src-tile); src-tile is the reduction axis.
    # ========================================================================
    S_ROWS = 8                               # sublane-aligned partial-sum rows per dst tile

    def gcn_kernel(adj_ref, z_ref, b_ref, fcw_ref, fcb_ref, alpha_ref,
                   h_ref, stats_ref, acc_ref, deg_ref):
        # Hoisted grid indices: program_id must NOT be called inside pl.when bodies.
        m_idx = pl.program_id(0)
        i_idx = pl.program_id(1)
        k_idx = pl.program_id(2)
        nk = pl.num_programs(2)

        @pl.when(k_idx == 0)
        def _():
            acc_ref[...] = jnp.zeros_like(acc_ref)
            deg_ref[...] = jnp.zeros_like(deg_ref)

        a = adj_ref[0].astype(jnp.bfloat16)              # int8 {0,1} -> bf16 (exact)
        acc_ref[...] += jnp.dot(a, z_ref[0], preferred_element_type=jnp.float32)
        deg_ref[...] += jnp.sum(a.astype(jnp.float32), axis=1, keepdims=True)  # in-degree

        @pl.when(k_idx == nk - 1)
        def _():
            deg = jnp.maximum(deg_ref[...], 1.0)         # DGL clamp(min=1)
            hf = acc_ref[...] / deg + b_ref[0]           # right-norm + bias
            alpha = alpha_ref[m_idx]                     # SMEM scalar PReLU slope
            hf = jnp.where(hf >= 0.0, hf, alpha * hf)    # PReLU
            h_bf = hf.astype(jnp.bfloat16)
            h_ref[0] = h_bf
            # Fused semantic-attention statistics: partial row-sums of tanh(h @ Wfc^T + bfc)
            t = jnp.tanh(jnp.dot(h_bf, fcw_ref[...],
                                 preferred_element_type=jnp.float32) + fcb_ref[...])
            row = i_idx * TM + lax.broadcasted_iota(jnp.int32, (TM, Hp), 0)
            t = jnp.where(row < N, t, 0.0)               # drop padded node rows
            stats_ref[0] = jnp.sum(t.reshape(TM // S_ROWS, S_ROWS, Hp), axis=0)

    gcn_vmem = (2 * (TM * TK * 1 + TK * Hp * 2 + TM * Hp * 2)   # adj/z/h double buffers
                + TM * TK * 2                                   # widened adjacency temp
                + TM * Hp * 4 + TM * 128 * 4                    # acc + deg scratch
                + 2 * Hp * Hp * 2)                              # fc weight
    h, stats = pl.pallas_call(
        gcn_kernel,
        out_shape=(jax.ShapeDtypeStruct((M, N_pad, Hp), bf16),
                   jax.ShapeDtypeStruct((M, n_i * S_ROWS, Hp), f32)),
        grid=(M, n_i, n_k),
        in_specs=[
            pl.BlockSpec((1, TM, TK), lambda m, i, k: (m, i, k)),
            pl.BlockSpec((1, TK, Hp), lambda m, i, k: (m, k, 0)),
            pl.BlockSpec((1, 1, Hp), lambda m, i, k: (m, 0, 0)),
            pl.BlockSpec((Hp, Hp), lambda m, i, k: (0, 0)),
            pl.BlockSpec((1, Hp), lambda m, i, k: (0, 0)),
            pl.BlockSpec(memory_space=pltpu.MemorySpace.SMEM),   # alpha: whole (M,) in SMEM
        ],
        out_specs=(
            pl.BlockSpec((1, TM, Hp), lambda m, i, k: (m, i, 0)),
            pl.BlockSpec((1, S_ROWS, Hp), lambda m, i, k: (m, i, 0)),
        ),
        scratch_shapes=[pltpu.VMEM((TM, Hp), jnp.float32),
                        pltpu.VMEM((TM, 1), jnp.float32)],
        compiler_params=_compiler_params(("parallel", "parallel", "arbitrary"), gcn_vmem),
        cost_estimate=pl.CostEstimate(
            flops=2 * M * N_pad * N_pad * Hp + 2 * M * N_pad * Hp * Hp,
            transcendentals=M * N_pad * Hp,
            bytes_accessed=(M * N_pad * N_pad                    # int8 adjacency
                            + 2 * n_i * M * N_pad * Hp           # bf16 Z (re-read per dst tile)
                            + 2 * M * N_pad * Hp                 # bf16 h out
                            + 4 * M * n_i * S_ROWS * Hp)),       # stats out
    )(adj_p, z, b_p, fc_wT_p, fc_b_p, alpha_p)

    # ========================================================================
    # Kernel 3: softmax over metapaths of the attention logits (tiny, one shot).
    # ========================================================================
    inv_n = 1.0 / float(N)

    def beta_kernel(stats_ref, attn_ref, beta_ref):
        mean = jnp.sum(stats_ref[...], axis=1) * inv_n                # (M, Hp)
        w = jnp.sum(mean * attn_ref[...], axis=1, keepdims=True)      # (M, 1)
        w = w - jnp.max(w, axis=0, keepdims=True)
        e = jnp.exp(w)
        beta = e / jnp.sum(e, axis=0, keepdims=True)                  # softmax over metapaths
        beta_ref[...] = jnp.broadcast_to(beta, (M, Hp))

    beta_b = pl.pallas_call(
        beta_kernel,
        out_shape=jax.ShapeDtypeStruct((M, Hp), f32),
        grid=(1,),
        in_specs=[
            pl.BlockSpec((M, n_i * S_ROWS, Hp), lambda i: (0, 0, 0)),
            pl.BlockSpec((1, Hp), lambda i: (0, 0)),
        ],
        out_specs=pl.BlockSpec((M, Hp), lambda i: (0, 0)),
    )(stats, attn_p)

    # ========================================================================
    # Kernel 4: out[n] = sum_m beta[m] * h[m, n]   (streamed over node tiles)
    # ========================================================================
    def combine_kernel(beta_ref, h_ref, out_ref):
        acc = beta_ref[0:1, :] * h_ref[0].astype(jnp.float32)
        for m in range(1, M):
            acc = acc + beta_ref[m:m + 1, :] * h_ref[m].astype(jnp.float32)
        out_ref[...] = acc

    comb_vmem = 2 * (M * TN * Hp * 2 + TN * Hp * 4) + M * Hp * 4
    out_p = pl.pallas_call(
        combine_kernel,
        out_shape=jax.ShapeDtypeStruct((N_pad, Hp), f32),
        grid=(n_n,),
        in_specs=[
            pl.BlockSpec((M, Hp), lambda i: (0, 0)),
            pl.BlockSpec((M, TN, Hp), lambda i: (0, i, 0)),
        ],
        out_specs=pl.BlockSpec((TN, Hp), lambda i: (i, 0)),
        compiler_params=_compiler_params(("parallel",), comb_vmem),
        cost_estimate=pl.CostEstimate(
            flops=2 * M * N_pad * Hp, transcendentals=0,
            bytes_accessed=2 * M * N_pad * Hp + 4 * N_pad * Hp + 4 * M * Hp),
    )(beta_b, h)

    return out_p[:N, :hidden]


# ----------------------------------------------------------------------------
# Pure-JAX reference (matches the PyTorch module; for correctness check)
# ----------------------------------------------------------------------------
def metapath_encoder_ref(adjs, feats, gcn_w, gcn_b, gcn_alpha, fc_w, fc_b, attn_vec):
    hs = []
    M = adjs.shape[0]
    for m in range(M):
        z = feats[m] @ gcn_w[m]
        agg = adjs[m] @ z
        deg = jnp.maximum(jnp.sum(adjs[m], axis=1, keepdims=True), 1.0)
        hm = agg / deg + gcn_b[m]
        a = gcn_alpha[m, 0, 0]
        hs.append(jnp.where(hm >= 0.0, hm, a * hm))
    h = jnp.stack(hs, axis=1)                                    # (N, M, d)
    t = jnp.tanh(jnp.einsum('nmd,ed->nme', h, fc_w) + fc_b[None, :, :])
    w = jnp.mean(t, axis=0) @ attn_vec.T                         # (M, 1)
    beta = jax.nn.softmax(w, axis=0)
    return jnp.sum(beta[None, :, :] * h, axis=1)


if __name__ == "__main__":
    key = jax.random.PRNGKey(0)
    N, M, IN_DIM, HIDDEN = 16, 3, 8, 32
    gain = 2.0 ** 0.5  # nn.init.calculate_gain('relu')

    k = jax.random.split(key, 8)
    adjs = (jax.random.uniform(k[0], (M, N, N)) < 0.3).astype(jnp.float32)
    feats = jax.random.normal(k[1], (M, N, IN_DIM), dtype=jnp.float32)

    gcn_w = jax.random.normal(k[2], (M, IN_DIM, HIDDEN), jnp.float32) * (
        (2.0 / (IN_DIM + HIDDEN)) ** 0.5)
    gcn_b = jnp.zeros((M, 1, HIDDEN), jnp.float32)
    gcn_alpha = jnp.full((M, 1, 1), 0.25, jnp.float32)           # PReLU default slope

    fc_w = jax.random.normal(k[3], (HIDDEN, HIDDEN), jnp.float32) * (
        gain * (2.0 / (HIDDEN + HIDDEN)) ** 0.5)
    fc_b = jnp.zeros((1, HIDDEN), jnp.float32)
    attn_vec = jax.random.normal(k[4], (1, HIDDEN), jnp.float32) * (
        gain * (2.0 / (1 + HIDDEN)) ** 0.5)

    out = metapath_encoder(adjs, feats, gcn_w, gcn_b, gcn_alpha, fc_w, fc_b, attn_vec)
    out = jax.block_until_ready(out)

    ref = metapath_encoder_ref(adjs, feats, gcn_w, gcn_b, gcn_alpha, fc_w, fc_b, attn_vec)
    assert out.shape == (N, HIDDEN)
    assert jnp.allclose(out, ref, atol=1e-2, rtol=1e-2), "mismatch vs JAX reference"

    print("KERNEL_OK")
</pallas_src>

<mosaic_0001>
module attributes {stable_mosaic.version = 11 : i64} {
  func.func @project_kernel(%arg0: i32, %arg1: i32, %arg2: memref<1x16x8xf32, #tpu.memory_space<vmem>>, %arg3: memref<1x8x128xf32, #tpu.memory_space<vmem>>, %arg4: memref<1x16x128xbf16, #tpu.memory_space<vmem>>) attributes {dimension_semantics = [#tpu.dimension_semantics<parallel>, #tpu.dimension_semantics<parallel>], iteration_bounds = array<i64: 3, 1>, scalar_prefetch = 0 : i64, scratch_operands = 0 : i64, tpu.core_type = #tpu.core_type<tc>, window_params = [{transform_indices = @transform_0, window_bounds = array<i64: 1, 16, 8>}, {transform_indices = @transform_1, window_bounds = array<i64: 1, 8, 128>}, {transform_indices = @transform_2, window_bounds = array<i64: 1, 16, 128>}]} {
    %c0 = arith.constant 0 : index
    %c0_0 = arith.constant 0 : index
    %c0_1 = arith.constant 0 : index
    %0 = vector.load %arg2[%c0, %c0_0, %c0_1] : memref<1x16x8xf32, #tpu.memory_space<vmem>>, vector<1x16x8xf32>
    %1 = vector.shape_cast %0 : vector<1x16x8xf32> to vector<16x8xf32>
    %c0_2 = arith.constant 0 : index
    %c0_3 = arith.constant 0 : index
    %c0_4 = arith.constant 0 : index
    %2 = vector.load %arg3[%c0_2, %c0_3, %c0_4] : memref<1x8x128xf32, #tpu.memory_space<vmem>>, vector<1x8x128xf32>
    %3 = vector.shape_cast %2 : vector<1x8x128xf32> to vector<8x128xf32>
    %cst = arith.constant dense<0.000000e+00> : vector<16x128xf32>
    %4 = tpu.matmul %1, %3, %cst {dimension_numbers = #tpu.dot_dimension_numbers<[1], [0], [0], [1], [0, 0, 1, 1], [], []>} : vector<16x8xf32>, vector<8x128xf32>, vector<16x128xf32> -> vector<16x128xf32>
    %5 = arith.truncf %4 : vector<16x128xf32> to vector<16x128xbf16>
    %c0_5 = arith.constant 0 : index
    %c0_6 = arith.constant 0 : index
    %c0_7 = arith.constant 0 : index
    %6 = vector.load %arg4[%c0_5, %c0_6, %c0_7] : memref<1x16x128xbf16, #tpu.memory_space<vmem>>, vector<1x16x128xbf16>
    %7 = vector.shape_cast %6 : vector<1x16x128xbf16> to vector<16x128xbf16>
    %8 = vector.shape_cast %5 : vector<16x128xbf16> to vector<1x16x128xbf16>
    tpu.vector_store %arg4[%c0_5, %c0_6, %c0_7], %8 {strides = array<i32>} : memref<1x16x128xbf16, #tpu.memory_space<vmem>>, vector<1x16x128xbf16>,
    return
  }
  func.func @transform_0(%arg0: i32, %arg1: i32) -> (i32, i32, i32) {
    %c0_i32 = arith.constant 0 : i32
    %c0_i32_0 = arith.constant 0 : i32
    return %arg0, %arg1, %c0_i32 : i32, i32, i32
  }
  func.func @transform_1(%arg0: i32, %arg1: i32) -> (i32, i32, i32) {
    %c0_i32 = arith.constant 0 : i32
    %c0_i32_0 = arith.constant 0 : i32
    %c0_i32_1 = arith.constant 0 : i32
    return %arg0, %c0_i32, %c0_i32_0 : i32, i32, i32
  }
  func.func @transform_2(%arg0: i32, %arg1: i32) -> (i32, i32, i32) {
    %c0_i32 = arith.constant 0 : i32
    %c0_i32_0 = arith.constant 0 : i32
    return %arg0, %arg1, %c0_i32 : i32, i32, i32
  }
}

</mosaic_0001>

<llo_original>
// kernel: tpu_custom_call.1
$region0: #{tpu_custom_call.1}
  #allocation0 [shape = 'u32[]', space=smem, size = 0x4, offset = 0x4, fixed_abs, tag = 'smem constant byte address 0x4 - core index']
  #allocation1 [shape = 'u32[144,128]{1,0:T(1,128)}', space=vmem, size = 0x12000, scoped, tag = 'internal scratch']
  %s0 = inlined_call_operand.vmem [shape: f32[3,16,8], index: 0, kind: input, shape index: {}]
  %s1 = inlined_call_operand.vmem [shape: f32[3,8,128], index: 1, kind: input, shape index: {}]
  %s2 = inlined_call_operand.hbm [shape: bf16[3,16,128], index: 2, kind: output, shape index: {}]
  %s3 = sld [smem:[#allocation0]]
  $region41: #{tpu_custom_call.1} parent=0
    _
  %s5 = ssub.s32 1, %s3
  %s6 = scalar_select 0, %s5, %s3
  $region1: #{tpu_custom_call.1} parent=0
    #allocation2 [shape = 'u8[8192]{0}', space=vmem, size = 0x2000, scoped, tag = 'output window, operand 0']
    #allocation3 [shape = 's32[2]{0}', space=sflag, size = 0x8, scoped, tag = 'scoped memory for tpu_custom_call.1']
    %7 = vsyncpa [#allocation3], 0
    %s8 = scalar_lea.sflag [#allocation3], 1
    %9 = vsyncpa %s8, 0
    loop: start=0, step=1, limit=5
    $region2: #{tpu_custom_call.1} parent=1 // loop_pre_header
      _
    $region3: #{tpu_custom_call.1} parent=1 // loop_header
      %s11 = sphi 0, %s15
      %p12 = scmp.ge.s32.totalorder %s11, 5
      %s18 = sphi 0, %s30
      %s19 = sphi 0, %s26
      %s20 = sphi 0, %s18
      %s21 = sphi 0, %s19
      %s22 = sphi 0, %s20
      %s23 = sphi 0, %s21
      %s35 = sphi 0, %s37
      %s38 = sphi 0, %s35
      %s39 = sphi 0, %s38
      %s55 = sphi 0, %s39
      %s61 = sphi 0, %s63
      %s64 = sphi 0, %s61
      %s65 = sphi 0, %s64
      %s81 = sphi 0, %s65
      %s89 = sphi 0, %s91
      %s92 = sphi 0, %s89
      %s93 = sphi 0, %s92
      %s109 = sphi 0, %s93
    $region4: #{tpu_custom_call.1} parent=1 // loop_header_branch
      %14 = sbr.rel (%p12) target = $region8
    $region5: #{tpu_custom_call.1} parent=1 // loop_body
      %s16 = ssub.s32 %s11, 1
      %s17 = ssub.s32 %s11, 2
      %s24 = sadd.s32 1, %s19
      %p25 = scmp.ge.s32.totalorder %s24, 1
      %s26 = scalar_select %p25, 0, %s24
      %s27 = sadd.s32 1, %s18
      %s28 = scalar_select %p25, %s27, %s18
      %p29 = scmp.ge.s32.totalorder %s28, 3
      %s30 = scalar_select %p29, 0, %s28
      %s31 = ssub.s32 %s18, %s30
      %s32 = ssub.s32 %s19, %s26
      %s33 = sor.u32 %s31, %s32
      %p34 = scmp.eq.s32.totalorder %s33, 0
      %s36 = sadd.s32 %s35, 1
      %s37 = scalar_select %p34, %s35, %s36
      %p40 = pneg %p34
      %p41 = scmp.eq.s32.totalorder %s11, 2
      %p42 = por %p40, %p41
      %p43 = scmp.ne.s32.totalorder %s35, %s38
      %p44 = scmp.eq.s32.totalorder %s11, 0
      %p45 = por %p43, %p44
      %p46 = scmp.ne.s32.totalorder %s35, %s38
      %p47 = scmp.eq.s32.totalorder %s16, 2
      %p48 = por %p46, %p47
      %p49 = scmp.ne.s32.totalorder %s38, %s39
      %p50 = scmp.eq.s32.totalorder %s16, 0
      %p51 = por %p49, %p50
      %p52 = scmp.ne.s32.totalorder %s38, %s39
      %p53 = scmp.eq.s32.totalorder %s17, 2
      %p54 = por %p52, %p53
      %p56 = scmp.ne.s32.totalorder %s39, %s55
      %p57 = scmp.eq.s32.totalorder %s17, 0
      %p58 = por %p56, %p57
      %s59 = ssub.s32 %s18, %s30
      %p60 = scmp.eq.s32.totalorder %s59, 0
      %s62 = sadd.s32 %s61, 1
      %s63 = scalar_select %p60, %s61, %s62
      %p66 = pneg %p60
      %p67 = scmp.eq.s32.totalorder %s11, 2
      %p68 = por %p66, %p67
      %p69 = scmp.ne.s32.totalorder %s61, %s64
      %p70 = scmp.eq.s32.totalorder %s11, 0
      %p71 = por %p69, %p70
      %p72 = scmp.ne.s32.totalorder %s61, %s64
      %p73 = scmp.eq.s32.totalorder %s16, 2
      %p74 = por %p72, %p73
      %p75 = scmp.ne.s32.totalorder %s64, %s65
      %p76 = scmp.eq.s32.totalorder %s16, 0
      %p77 = por %p75, %p76
      %p78 = scmp.ne.s32.totalorder %s64, %s65
      %p79 = scmp.eq.s32.totalorder %s17, 2
      %p80 = por %p78, %p79
      %p82 = scmp.ne.s32.totalorder %s65, %s81
      %p83 = scmp.eq.s32.totalorder %s17, 0
      %p84 = por %p82, %p83
      %s85 = ssub.s32 %s18, %s30
      %s86 = ssub.s32 %s19, %s26
      %s87 = sor.u32 %s85, %s86
      %p88 = scmp.eq.s32.totalorder %s87, 0
      %s90 = sadd.s32 %s89, 1
      %s91 = scalar_select %p88, %s89, %s90
      %p94 = pneg %p88
      %p95 = scmp.eq.s32.totalorder %s11, 2
      %p96 = por %p94, %p95
      %p97 = scmp.ne.s32.totalorder %s89, %s92
      %p98 = scmp.eq.s32.totalorder %s11, 0
      %p99 = por %p97, %p98
      %p100 = scmp.ne.s32.totalorder %s89, %s92
      %p101 = scmp.eq.s32.totalorder %s16, 2
      %p102 = por %p100, %p101
      %p103 = scmp.ne.s32.totalorder %s92, %s93
      %p104 = scmp.eq.s32.totalorder %s16, 0
      %p105 = por %p103, %p104
      %p106 = scmp.ne.s32.totalorder %s92, %s93
      %p107 = scmp.eq.s32.totalorder %s17, 2
      %p108 = por %p106, %p107
      %p110 = scmp.ne.s32.totalorder %s93, %s109
      %p111 = scmp.eq.s32.totalorder %s17, 0
      %p112 = por %p110, %p111
      %p113 = scmp.le.s32.totalorder 1, %s11
      %p114 = scmp.lt.s32.totalorder %s11, 4
      %p115 = pnand %p113, %p114
      %p116 = pneg %p115
      // Predicated region
      $region9: #{tpu_custom_call.1} parent=5 // pred_check
        _
      $region10: #{tpu_custom_call.1} parent=5 // pred_check_branch
        %118 = sbr.rel (%p115) target = $region12
      $region11: #{tpu_custom_call.1} parent=5 // pred_region
        %s119 = ssub.s32 %s11, 1
      $region12: #{tpu_custom_call.1} parent=5 // pred_fallthru
        _
      %p120 = scmp.lt.s32.totalorder %s11, 3
      // Predicated region
      $region13: #{tpu_custom_call.1} parent=5 // pred_check
        %p121 = pneg %p120
      $region14: #{tpu_custom_call.1} parent=5 // pred_check_branch
        %123 = sbr.rel (%p121) target = $region16
      $region15: #{tpu_custom_call.1} parent=5 // pred_region
        // Predicated region
        $region17: #{tpu_custom_call.1} parent=15 // pred_check
          %p124 = pneg %p45
        $region18: #{tpu_custom_call.1} parent=15 // pred_check_branch
          %126 = sbr.rel (%p124) target = $region20
        $region19: #{tpu_custom_call.1} parent=15 // pred_region
          %s127 = smul.u32 2, %s19
          %p128 = scmp.lt.s32.totalorder %s18, 2
          %s129 = scalar_select %p128, %s18, 2
          %p130 = scmp.lt.s32.totalorder %s127, 1
          %s131 = scalar_select %p130, %s127, 1
          %s132 = smul.addr %s129, 2
          %s133 = sadd.s32 %s131, %s132
          %s134 = smul.addr %s133, 8
          %s135 = scalar_lea.vmem %s0, %s134
          %s136 = smul.u32 2, %s19
        $region20: #{tpu_custom_call.1} parent=15 // pred_fallthru
          _
        // Predicated region
        $region21: #{tpu_custom_call.1} parent=15 // pred_check
          %p137 = pneg %p71
        $region22: #{tpu_custom_call.1} parent=15 // pred_check_branch
          %139 = sbr.rel (%p137) target = $region24
        $region23: #{tpu_custom_call.1} parent=15 // pred_region
          %p140 = scmp.lt.s32.totalorder %s18, 2
          %s141 = scalar_select %p140, %s18, 2
          %s142 = smul.addr %s141, 8
          %s143 = scalar_lea.vmem %s1, %s142
        $region24: #{tpu_custom_call.1} parent=15 // pred_fallthru
          _
      $region16: #{tpu_custom_call.1} parent=5 // pred_fallthru
        _
      %p144 = scmp.le.s32.totalorder 1, %s11
      %p145 = scmp.lt.s32.totalorder %s11, 4
      %p146 = pnand %p144, %p145
      %p147 = pneg %p146
      // Predicated region
      $region25: #{tpu_custom_call.1} parent=5 // pred_check
        _
      $region26: #{tpu_custom_call.1} parent=5 // pred_check_branch
        %149 = sbr.rel (%p146) target = $region28
      $region27: #{tpu_custom_call.1} parent=5 // pred_region
        %s150 = ssub.s32 %s11, 1
        %s151 = smul.u32 2, %s21
        %p152 = scmp.lt.s32.totalorder %s20, 2
        %s153 = scalar_select %p152, %s20, 2
        %p154 = scmp.lt.s32.totalorder %s151, 1
        %s155 = scalar_select %p154, %s151, 1
        %s156 = smul.addr %s153, 2
        %s157 = sadd.s32 %s155, %s156
        %s158 = smul.addr %s157, 8
        %s159 = scalar_lea.vmem %s0, %s158
        %p160 = pneg %p51
        %p161 = pneg %p48
        %p162 = scmp.lt.s32.totalorder %s20, 2
        %s163 = scalar_select %p162, %s20, 2
        %s164 = smul.addr %s163, 8
        %s165 = scalar_lea.vmem %s1, %s164
        %p166 = pneg %p77
        %p167 = pneg %p74
        %p168 = pneg %p105
        %p169 = pneg %p102
        %s170 = sand.u32 %s92, 1
        %s171 = scalar_lea.sflag [#allocation3], %s170
        %s172 = sand.u32 %s92, 1
        %s173 = smul.addr %s172, 8
        %s174 = scalar_lea.vmem [#allocation2], %s173
        %s175 = smul.u32 2, %s21
        %p176 = scmp.lt.s32.totalorder %s20, 2
        %s177 = scalar_select %p176, %s20, 2
        %p178 = scmp.lt.s32.totalorder %s175, 1
        %s179 = scalar_select %p178, %s175, 1
        %s180 = smul.addr %s177, 2
        %s181 = sadd.s32 %s179, %s180
        %s182 = smul.addr %s181, 8
        %s183 = scalar_lea.vmem %s0, %s182
        %s184 = smul.u32 2, %s21
        %p185 = scmp.lt.s32.totalorder %s20, 2
        %s186 = scalar_select %p185, %s20, 2
        %s187 = smul.addr %s186, 8
        %s188 = scalar_lea.vmem %s1, %s187
        %s189 = smul.u32 2, %s21
        %v190 = vld [vmem:[%s183] sm:$0xff]
        %v191 = vld [vmem:[%s183 + $0x8] sm:$0xff]
        %v192 = vld [vmem:[%s188] sm:$0xff]
        %vm193 = vcmask 64512
        %v195 = vsel %vm193, %v190, 0
        %v198 = vsel %vm193, %v191, 0
        %200 = vmatprep.subr.mxu0 0.0
        %201 = vmatpush1.msra.mxu0 0.0
        %202 = vmatprep.subr.mxu0 0.0
        %203 = vmatpush1.msra.mxu0 0.0
        %204 = vmatprep.subr.mxu0 0.0
        %205 = vmatpush1.msra.mxu0 0.0
        %206 = vmatprep.subr.mxu0 0.0
        %207 = vmatpush1.msra.mxu0 0.0
        %208 = vmatprep.subr.mxu0 0.0
        %209 = vmatpush1.msra.mxu0 0.0
        %210 = vmatprep.subr.mxu0 0.0
        %211 = vmatpush1.msra.mxu0 0.0
        %212 = vmatprep.subr.mxu0 0.0
        %213 = vmatpush1.msra.mxu0 0.0
        %214 = vmatprep.subr.mxu0 0.0
        %215 = vmatpush1.msra.mxu0 0.0
        %216 = vmatprep.subr.mxu0 0.0
        %217 = vmatpush1.msra.mxu0 0.0
        %218 = vmatprep.subr.mxu0 0.0
        %219 = vmatpush1.msra.mxu0 0.0
        %220 = vmatprep.subr.mxu0 0.0
        %221 = vmatpush1.msra.mxu0 0.0
        %222 = vmatprep.subr.mxu0 0.0
        %223 = vmatpush1.msra.mxu0 0.0
        %224 = vmatprep.subr.mxu0 0.0
        %225 = vmatpush1.msra.mxu0 0.0
        %226 = vmatprep.subr.mxu0 0.0
        %227 = vmatpush1.msra.mxu0 0.0
        %228 = vmatprep.subr.mxu0 0.0
        %229 = vmatpush1.msra.mxu0 0.0
        %230 = vmatprep.subr.mxu0 0.0
        %231 = vmatpush1.msra.mxu0 %v192
        %232 = vmatprep.subr.mxu0 0.0
        %233 = vmatpush2.msra.mxu0 0.0
        %234 = vmatprep.subr.mxu0 0.0
        %235 = vmatpush2.msra.mxu0 0.0
        %236 = vmatprep.subr.mxu0 0.0
        %237 = vmatpush2.msra.mxu0 0.0
        %238 = vmatprep.subr.mxu0 0.0
        %239 = vmatpush2.msra.mxu0 0.0
        %240 = vmatprep.subr.mxu0 0.0
        %241 = vmatpush2.msra.mxu0 0.0
        %242 = vmatprep.subr.mxu0 0.0
        %243 = vmatpush2.msra.mxu0 0.0
        %244 = vmatprep.subr.mxu0 0.0
        %245 = vmatpush2.msra.mxu0 0.0
        %246 = vmatprep.subr.mxu0 0.0
        %247 = vmatpush2.msra.mxu0 0.0
        %248 = vmatprep.subr.mxu0 0.0
        %249 = vmatpush2.msra.mxu0 0.0
        %250 = vmatprep.subr.mxu0 0.0
        %251 = vmatpush2.msra.mxu0 0.0
        %252 = vmatprep.subr.mxu0 0.0
        %253 = vmatpush2.msra.mxu0 0.0
        %254 = vmatprep.subr.mxu0 0.0
        %255 = vmatpush2.msra.mxu0 0.0
        %256 = vmatprep.subr.mxu0 0.0
        %257 = vmatpush2.msra.mxu0 0.0
        %258 = vmatprep.subr.mxu0 0.0
        %259 = vmatpush2.msra.mxu0 0.0
        %260 = vmatprep.subr.mxu0 0.0
        %261 = vmatpush2.msra.mxu0 0.0
        %262 = vmatprep.subr.mxu0 0.0
        %263 = vmatpush2.msra.mxu0 0.0
        %264 = vmatprep.mubr.f32.mxu0 0.0
        %265 = vmatmul.mubr.f32.gmra.mxu0 %v195
        %v266 = vpop.f32.mrf.mxu0
        %v267 = vadd.f32 0.0, %v266
        %v268 = vpop.f32.mrf.mxu0
        %269 = vmatprep.mubr.f32.mxu0 0.0
        %270 = vmatmul.mubr.f32.gmra.mxu0 %v198
        %v271 = vpop.f32.mrf.mxu0
        %v272 = vadd.f32 0.0, %v271
        %v273 = vpop.f32.mrf.mxu0
        %274 = vdwg.mxu0
        %v275 = vpack.c.bf16 %v272, %v267
        %v277 = vunpack.c.l.b16 %v275
        %v278 = vunpack.c.h.b16 %v275
        %v279 = vpack.c.b16 %v277, %v277
        %v280 = vpack.c.b16 %v278, %v278
        %283 = vst [vmem:[%s174] sm:$0xf] %v279
        %284 = vst [vmem:[%s174 + $0x4] sm:$0xf] %v280
        %s285 = sand.u32 %s92, 1
        %s286 = scalar_lea.sflag [#allocation3], %s285
        %s287 = sand.u32 %s92, 1
        %s288 = smul.addr %s287, 8
        %s289 = scalar_lea.vmem [#allocation2], %s288
        // Predicated region
        $region29: #{tpu_custom_call.1} parent=27 // pred_check
          %p290 = pneg %p102
        $region30: #{tpu_custom_call.1} parent=27 // pred_check_branch
          %292 = sbr.rel (%p290) target = $region32
        $region31: #{tpu_custom_call.1} parent=27 // pred_region
          %s293 = smul.u32 2, %s21
          %s295 = ssub.s32 128, 128
          %296 = vsyncadd %s286, %s295
          %s297 = smul.addr %s20, 2
          %s298 = sadd.s32 %s293, %s297
          %s299 = smul.addr %s298, 64
          %s300 = scalar_lea.hbm %s2, %s299
          %s301 = sshll.u32 %s289, 4
          %s302 = int_to_ptr.vmem [resolvable:$true] %s301
          %307 = dma.vmem_to_hbm [thread:$0]  %s302, 128, %s300, %s286, 64, 64, 4
        $region32: #{tpu_custom_call.1} parent=27 // pred_fallthru
          _
      $region28: #{tpu_custom_call.1} parent=5 // pred_fallthru
        _
      %p308 = scmp.le.s32.totalorder 2, %s11
      // Predicated region
      $region33: #{tpu_custom_call.1} parent=5 // pred_check
        %p309 = pneg %p308
      $region34: #{tpu_custom_call.1} parent=5 // pred_check_branch
        %311 = sbr.rel (%p309) target = $region36
      $region35: #{tpu_custom_call.1} parent=5 // pred_region
        %s312 = ssub.s32 %s11, 2
        // Predicated region
        $region37: #{tpu_custom_call.1} parent=35 // pred_check
          %p313 = pneg %p108
        $region38: #{tpu_custom_call.1} parent=35 // pred_check_branch
          %315 = sbr.rel (%p313) target = $region40
        $region39: #{tpu_custom_call.1} parent=35 // pred_region
          %s316 = sand.u32 %s93, 1
          %s317 = scalar_lea.sflag [#allocation3], %s316
          %s318 = sand.u32 %s93, 1
          %s319 = smul.addr %s318, 8
          %s320 = scalar_lea.vmem [#allocation2], %s319
          %321 = dma.done %s317, 128
        $region40: #{tpu_custom_call.1} parent=35 // pred_fallthru
          _
      $region36: #{tpu_custom_call.1} parent=5 // pred_fallthru
        _
    $region6: #{tpu_custom_call.1} parent=1 // loop_footer
      %s15 = sadd.s32 1, %s11
    $region7: #{tpu_custom_call.1} parent=1 // loop_footer_branch
      %10 = sbr.rel target = $region3
    $region8: #{tpu_custom_call.1} parent=1 // loop_exit
      _
    %322 = vsyncpa [#allocation3], 1
    %s323 = scalar_lea.sflag [#allocation3], 1
    %324 = vsyncpa %s323, 1

</llo_original>
